<compile_context>
chip_gen: v7x
topology: tpu7x:2x2x1
jax: 0.10.0
libtpu: 0.0.40
codegen_flags: <defaults>
</compile_context>

<pallas_src>
import functools

import jax
import jax.numpy as jnp
from jax.experimental import pallas as pl
from jax.experimental.pallas import tpu as pltpu


def _round_up(x, m):
    return ((x + m - 1) // m) * m


def gnn_kernel(x_ref, gamma_ref, beta_ref, adj_ref, w_ref, b_ref, out_ref,
               *, feat_dim):
    """One (batch b, node-k-tile) grid step.

    x_ref   : (1, TK, Fp)   node features of the k-tile of batch b (bf16, zero padded)
    gamma/beta_ref : (1, Fp)  LayerNorm affine (f32, zero padded)
    adj_ref : (1, NEp, TK)  entity-row slice of batch-b adjacency (bf16, zero padded)
    w_ref   : (Fp, Fp)      GCN weight (bf16, zero padded)
    b_ref   : (1, Fp)       GCN bias (f32, zero padded)
    out_ref : (1, NEp, Fp)  entity-row output of batch b (f32, resident across k,
                            used directly as the accumulator)
    """
    k = pl.program_id(1)

    @pl.when(k == 0)
    def _():
        out_ref[...] = jnp.zeros_like(out_ref)

    # --- mask-free LayerNorm over the feature axis (padding lanes are zero) ---
    x = x_ref[0].astype(jnp.float32)                                  # (TK, Fp)
    inv_f = jnp.float32(1.0 / feat_dim)
    mean = jnp.sum(x, axis=-1, keepdims=True) * inv_f
    mean_sq = jnp.sum(x * x, axis=-1, keepdims=True) * inv_f
    var = mean_sq - mean * mean
    xn = (x - mean) * jax.lax.rsqrt(var + 1e-5)
    xn = xn * gamma_ref[...] + beta_ref[...]                          # (TK, Fp)

    # --- accumulate A_entity_rows @ LN(X_tile) (bf16 MXU, f32 accumulation) ---
    out_ref[0] += jnp.dot(adj_ref[0], xn.astype(jnp.bfloat16),
                          preferred_element_type=jnp.float32)         # (NEp, Fp)

    # --- finalize: apply W once, bias, ReLU ---
    @pl.when(k == pl.num_programs(1) - 1)
    def _():
        acc = out_ref[0].astype(jnp.bfloat16)                         # (NEp, Fp)
        res = jnp.dot(acc, w_ref[...],
                      preferred_element_type=jnp.float32) + b_ref[...]
        out_ref[0] = jnp.maximum(res, 0.0)


@jax.jit
def gnn_forward(mention_hidden_state, entity_hidden_state, sent_hidden_state,
                graph_adj, params):
    """Mirrors GNN.forward; returns the entity slice of the GNN output (B, Ne, F).

    graph_adj may be (B, N, N) per-batch graphs or a dense block-diagonal
    (B*N, B*N) matrix (the PyTorch reshape to (B*N, -1) implies no cross-batch
    edges; cross-batch entries of a dense input are ignored).
    """
    bf16 = jnp.bfloat16
    f32 = jnp.float32

    B, Nm, H = mention_hidden_state.shape
    Ne = int(entity_hidden_state.shape[1])
    Ns = int(sent_hidden_state.shape[1])
    emb = params["node_type_embedding"]                               # (3, E)
    E = emb.shape[1]
    F = H + E
    N = Nm + Ne + Ns

    # Glue (fused under jit): type-embedding concat, node concat, cast to bf16.
    m = jnp.concatenate(
        [mention_hidden_state.astype(bf16),
         jnp.broadcast_to(emb[0].astype(bf16)[None, None, :], (B, Nm, E))], axis=2)
    e = jnp.concatenate(
        [entity_hidden_state.astype(bf16),
         jnp.broadcast_to(emb[1].astype(bf16)[None, None, :], (B, Ne, E))], axis=2)
    s = jnp.concatenate(
        [sent_hidden_state.astype(bf16),
         jnp.broadcast_to(emb[2].astype(bf16)[None, None, :], (B, Ns, E))], axis=2)
    nodes = jnp.concatenate([m, e, s], axis=1)                        # (B, N, F) bf16

    # Per-batch adjacency, restricted to the entity rows that are returned.
    if graph_adj.ndim == 2:
        adj_b = graph_adj.reshape(B, N, B, N)[jnp.arange(B), :, jnp.arange(B), :]
    else:
        adj_b = graph_adj                                             # (B, N, N)
    adj_ent = adj_b[:, Nm:Nm + Ne, :]                                 # (B, Ne, N)

    # ---- padding / tiling (lane-dense, VMEM-friendly on v5e/v6e/v7x) ----
    Fp = _round_up(max(F, 128), 128)        # lane-dense feature dim
    NEp = _round_up(Ne, 16)                 # bf16 sublane-packed entity rows
    if N <= 2048:
        TK = _round_up(N, 128)              # single k-tile, lane-aligned
        Np = TK
    else:
        TK = 2048                           # (1, 2048, Fp) bf16 tile, amortizes step overhead
        Np = _round_up(N, TK)
    n_k = Np // TK

    nodes_p = jnp.zeros((B, Np, Fp), bf16).at[:, :N, :F].set(nodes)
    adj_p = jnp.zeros((B, NEp, Np), bf16).at[:, :Ne, :N].set(adj_ent.astype(bf16))
    w_p = jnp.zeros((Fp, Fp), bf16).at[:F, :F].set(params["gcn_w"].astype(bf16))
    gamma_p = jnp.zeros((1, Fp), f32).at[0, :F].set(params["ln_gamma"].astype(f32))
    beta_p = jnp.zeros((1, Fp), f32).at[0, :F].set(params["ln_beta"].astype(f32))
    b_p = jnp.zeros((1, Fp), f32).at[0, :F].set(params["gcn_b"].astype(f32))

    kernel = functools.partial(gnn_kernel, feat_dim=F)

    out_p = pl.pallas_call(
        kernel,
        out_shape=jax.ShapeDtypeStruct((B, NEp, Fp), jnp.float32),
        grid_spec=pltpu.PrefetchScalarGridSpec(
            num_scalar_prefetch=0,
            grid=(B, n_k),
            in_specs=[
                pl.BlockSpec((1, TK, Fp), lambda b, k: (b, k, 0)),    # node features (bf16)
                pl.BlockSpec((1, Fp), lambda b, k: (0, 0)),           # ln gamma
                pl.BlockSpec((1, Fp), lambda b, k: (0, 0)),           # ln beta
                pl.BlockSpec((1, NEp, TK), lambda b, k: (b, 0, k)),   # adjacency (entity rows)
                pl.BlockSpec((Fp, Fp), lambda b, k: (0, 0)),          # GCN weight (bf16)
                pl.BlockSpec((1, Fp), lambda b, k: (0, 0)),           # GCN bias
            ],
            out_specs=pl.BlockSpec((1, NEp, Fp), lambda b, k: (b, 0, 0)),
        ),
        compiler_params=pltpu.CompilerParams(
            dimension_semantics=("parallel", "arbitrary")),
    )(nodes_p, gamma_p, beta_p, adj_p, w_p, b_p)

    return out_p[:, :Ne, :F]


if __name__ == "__main__":
    key = jax.random.PRNGKey(0)
    B, Nm, Ne, Ns = 2, 4, 3, 5          # batch, #mention, #entity, #sentence nodes
    H, E = 24, 8                         # hidden size, node-type embedding dim
    F = H + E                            # in_feat_dim = hidden + type-emb (LayerNorm dim)
    N = Nm + Ne + Ns

    k0, k1, k2, k3, k4 = jax.random.split(key, 5)
    mention = jax.random.normal(k0, (B, Nm, H), jnp.float32)
    entity = jax.random.normal(k1, (B, Ne, H), jnp.float32)
    sent = jax.random.normal(k2, (B, Ns, H), jnp.float32)

    params = {
        "node_type_embedding": jax.random.normal(k3, (3, E), jnp.float32),
        "ln_gamma": jnp.ones((F,), jnp.float32),
        "ln_beta": jnp.zeros((F,), jnp.float32),
        "gcn_w": jax.random.normal(k4, (F, F), jnp.float32) / jnp.sqrt(jnp.float32(F)),
        "gcn_b": jnp.zeros((F,), jnp.float32),
    }

    # Deterministic graph: block-diagonal, fully connected within each batch
    # (self-loops included), row-normalized (mean aggregation).
    block = jnp.ones((N, N), jnp.float32) / N
    adj = jnp.kron(jnp.eye(B, dtype=jnp.float32), block)              # (B*N, B*N)

    out = gnn_forward(mention, entity, sent, adj, params)
    out = jax.block_until_ready(out)
    assert out.shape == (B, Ne, F), out.shape

    # Pure-JAX f32 reference (loose tolerance: kernel uses bf16 MXU operands).
    emb = params["node_type_embedding"]
    m = jnp.concatenate([mention, jnp.broadcast_to(emb[0][None, None, :], (B, Nm, E))], 2)
    e = jnp.concatenate([entity, jnp.broadcast_to(emb[1][None, None, :], (B, Ne, E))], 2)
    s = jnp.concatenate([sent, jnp.broadcast_to(emb[2][None, None, :], (B, Ns, E))], 2)
    nd = jnp.concatenate([m, e, s], 1)
    mean = nd.mean(-1, keepdims=True)
    var = ((nd - mean) ** 2).mean(-1, keepdims=True)
    xn = (nd - mean) * jax.lax.rsqrt(var + 1e-5) * params["ln_gamma"] + params["ln_beta"]
    xw = xn.reshape(B * N, F) @ params["gcn_w"]
    ref = jnp.maximum(adj @ xw + params["gcn_b"], 0.0).reshape(B, N, F)[:, Nm:Nm + Ne]
    err = float(jnp.max(jnp.abs(out - ref)))
    assert err < 0.2, f"max abs error vs f32 reference: {err}"
    print("KERNEL_OK")
</pallas_src>

<mosaic_0001>
module attributes {stable_mosaic.version = 11 : i64} {
  func.func @gnn_kernel(%arg0: i32, %arg1: i32, %arg2: memref<1x128x128xbf16, #tpu.memory_space<vmem>>, %arg3: memref<1x128xf32, #tpu.memory_space<vmem>>, %arg4: memref<1x128xf32, #tpu.memory_space<vmem>>, %arg5: memref<1x16x128xbf16, #tpu.memory_space<vmem>>, %arg6: memref<128x128xbf16, #tpu.memory_space<vmem>>, %arg7: memref<1x128xf32, #tpu.memory_space<vmem>>, %arg8: memref<1x16x128xf32, #tpu.memory_space<vmem>>) attributes {dimension_semantics = [#tpu.dimension_semantics<parallel>, #tpu.dimension_semantics<arbitrary>], iteration_bounds = array<i64: 2, 1>, scalar_prefetch = 0 : i64, scratch_operands = 0 : i64, tpu.core_type = #tpu.core_type<tc>, window_params = [{transform_indices = @transform_0, window_bounds = array<i64: 1, 128, 128>}, {pipeline_mode = #tpu.pipeline_mode<synchronous>, transform_indices = @transform_1, window_bounds = array<i64: 1, 128>}, {pipeline_mode = #tpu.pipeline_mode<synchronous>, transform_indices = @transform_2, window_bounds = array<i64: 1, 128>}, {transform_indices = @transform_3, window_bounds = array<i64: 1, 16, 128>}, {pipeline_mode = #tpu.pipeline_mode<synchronous>, transform_indices = @transform_4, window_bounds = array<i64: 128, 128>}, {pipeline_mode = #tpu.pipeline_mode<synchronous>, transform_indices = @transform_5, window_bounds = array<i64: 1, 128>}, {transform_indices = @transform_6, window_bounds = array<i64: 1, 16, 128>}]} {
    %c0_i32 = arith.constant 0 : i32
    %0 = arith.cmpi eq, %arg1, %c0_i32 : i32
    %1 = arith.extui %0 : i1 to i32
    %c0_i32_0 = arith.constant 0 : i32
    %2 = arith.cmpi ne, %1, %c0_i32_0 : i32
    scf.if %2 {
      %cst_23 = arith.constant 0.000000e+00 : f32
      %43 = vector.broadcast %cst_23 : f32 to vector<1x16x128xf32>
      %c0_24 = arith.constant 0 : index
      %c0_25 = arith.constant 0 : index
      %c0_26 = arith.constant 0 : index
      %44 = vector.load %arg8[%c0_24, %c0_25, %c0_26] : memref<1x16x128xf32, #tpu.memory_space<vmem>>, vector<1x16x128xf32>
      tpu.vector_store %arg8[%c0_24, %c0_25, %c0_26], %43 {strides = array<i32>} : memref<1x16x128xf32, #tpu.memory_space<vmem>>, vector<1x16x128xf32>,
    } else {
    }
    %c0 = arith.constant 0 : index
    %c0_1 = arith.constant 0 : index
    %c0_2 = arith.constant 0 : index
    %3 = vector.load %arg2[%c0, %c0_1, %c0_2] : memref<1x128x128xbf16, #tpu.memory_space<vmem>>, vector<1x128x128xbf16>
    %4 = vector.shape_cast %3 : vector<1x128x128xbf16> to vector<128x128xbf16>
    %5 = arith.extf %4 : vector<128x128xbf16> to vector<128x128xf32>
    %cst = arith.constant dense<0.000000e+00> : vector<128xf32>
    %6 = vector.multi_reduction <add>, %5, %cst [1] : vector<128x128xf32> to vector<128xf32>
    %7 = vector.shape_cast %6 : vector<128xf32> to vector<128x1xf32>
    %cst_3 = arith.constant 3.125000e-02 : f32
    %8 = vector.broadcast %cst_3 : f32 to vector<128x1xf32>
    %9 = arith.mulf %7, %8 : vector<128x1xf32>
    %10 = arith.mulf %5, %5 : vector<128x128xf32>
    %cst_4 = arith.constant dense<0.000000e+00> : vector<128xf32>
    %11 = vector.multi_reduction <add>, %10, %cst_4 [1] : vector<128x128xf32> to vector<128xf32>
    %12 = vector.shape_cast %11 : vector<128xf32> to vector<128x1xf32>
    %cst_5 = arith.constant 3.125000e-02 : f32
    %13 = vector.broadcast %cst_5 : f32 to vector<128x1xf32>
    %14 = arith.mulf %12, %13 : vector<128x1xf32>
    %15 = arith.mulf %9, %9 : vector<128x1xf32>
    %16 = arith.subf %14, %15 : vector<128x1xf32>
    %17 = vector.broadcast %9 : vector<128x1xf32> to vector<128x128xf32>
    %18 = arith.subf %5, %17 : vector<128x128xf32>
    %cst_6 = arith.constant 9.99999974E-6 : f32
    %19 = vector.broadcast %cst_6 : f32 to vector<128x1xf32>
    %20 = arith.addf %16, %19 : vector<128x1xf32>
    %21 = math.rsqrt %20 : vector<128x1xf32>
    %22 = vector.broadcast %21 : vector<128x1xf32> to vector<128x128xf32>
    %23 = arith.mulf %18, %22 : vector<128x128xf32>
    %c0_7 = arith.constant 0 : index
    %c0_8 = arith.constant 0 : index
    %24 = vector.load %arg3[%c0_7, %c0_8] : memref<1x128xf32, #tpu.memory_space<vmem>>, vector<1x128xf32>
    %25 = vector.broadcast %24 : vector<1x128xf32> to vector<128x128xf32>
    %26 = arith.mulf %23, %25 : vector<128x128xf32>
    %c0_9 = arith.constant 0 : index
    %c0_10 = arith.constant 0 : index
    %27 = vector.load %arg4[%c0_9, %c0_10] : memref<1x128xf32, #tpu.memory_space<vmem>>, vector<1x128xf32>
    %28 = vector.broadcast %27 : vector<1x128xf32> to vector<128x128xf32>
    %29 = arith.addf %26, %28 : vector<128x128xf32>
    %c0_11 = arith.constant 0 : index
    %c0_12 = arith.constant 0 : index
    %c0_13 = arith.constant 0 : index
    %30 = vector.load %arg8[%c0_11, %c0_12, %c0_13] : memref<1x16x128xf32, #tpu.memory_space<vmem>>, vector<1x16x128xf32>
    %31 = vector.shape_cast %30 : vector<1x16x128xf32> to vector<16x128xf32>
    %c0_14 = arith.constant 0 : index
    %c0_15 = arith.constant 0 : index
    %c0_16 = arith.constant 0 : index
    %32 = vector.load %arg5[%c0_14, %c0_15, %c0_16] : memref<1x16x128xbf16, #tpu.memory_space<vmem>>, vector<1x16x128xbf16>
    %33 = vector.shape_cast %32 : vector<1x16x128xbf16> to vector<16x128xbf16>
    %34 = arith.truncf %29 : vector<128x128xf32> to vector<128x128xbf16>
    %cst_17 = arith.constant dense<0.000000e+00> : vector<16x128xf32>
    %35 = tpu.matmul %33, %34, %cst_17 {dimension_numbers = #tpu.dot_dimension_numbers<[1], [0], [0], [1], [0, 0, 1, 1], [], []>} : vector<16x128xbf16>, vector<128x128xbf16>, vector<16x128xf32> -> vector<16x128xf32>
    %36 = arith.addf %31, %35 : vector<16x128xf32>
    %c0_18 = arith.constant 0 : index
    %c0_19 = arith.constant 0 : index
    %c0_20 = arith.constant 0 : index
    %37 = vector.load %arg8[%c0_18, %c0_19, %c0_20] : memref<1x16x128xf32, #tpu.memory_space<vmem>>, vector<1x16x128xf32>
    %38 = vector.shape_cast %37 : vector<1x16x128xf32> to vector<16x128xf32>
    %39 = vector.shape_cast %36 : vector<16x128xf32> to vector<1x16x128xf32>
    tpu.vector_store %arg8[%c0_18, %c0_19, %c0_20], %39 {strides = array<i32>} : memref<1x16x128xf32, #tpu.memory_space<vmem>>, vector<1x16x128xf32>,
    %c0_i32_21 = arith.constant 0 : i32
    %40 = arith.cmpi eq, %arg1, %c0_i32_21 : i32
    %41 = arith.extui %40 : i1 to i32
    %c0_i32_22 = arith.constant 0 : i32
    %42 = arith.cmpi ne, %41, %c0_i32_22 : i32
    scf.if %42 {
      %c0_23 = arith.constant 0 : index
      %c0_24 = arith.constant 0 : index
      %c0_25 = arith.constant 0 : index
      %43 = vector.load %arg8[%c0_23, %c0_24, %c0_25] : memref<1x16x128xf32, #tpu.memory_space<vmem>>, vector<1x16x128xf32>
      %44 = vector.shape_cast %43 : vector<1x16x128xf32> to vector<16x128xf32>
      %45 = arith.truncf %44 : vector<16x128xf32> to vector<16x128xbf16>
      %c0_26 = arith.constant 0 : index
      %c0_27 = arith.constant 0 : index
      %46 = vector.load %arg6[%c0_26, %c0_27] : memref<128x128xbf16, #tpu.memory_space<vmem>>, vector<128x128xbf16>
      %cst_28 = arith.constant dense<0.000000e+00> : vector<16x128xf32>
      %47 = tpu.matmul %45, %46, %cst_28 {dimension_numbers = #tpu.dot_dimension_numbers<[1], [0], [0], [1], [0, 0, 1, 1], [], []>} : vector<16x128xbf16>, vector<128x128xbf16>, vector<16x128xf32> -> vector<16x128xf32>
      %c0_29 = arith.constant 0 : index
      %c0_30 = arith.constant 0 : index
      %48 = vector.load %arg7[%c0_29, %c0_30] : memref<1x128xf32, #tpu.memory_space<vmem>>, vector<1x128xf32>
      %49 = vector.broadcast %48 : vector<1x128xf32> to vector<16x128xf32>
      %50 = arith.addf %47, %49 : vector<16x128xf32>
      %cst_31 = arith.constant 0.000000e+00 : f32
      %51 = vector.broadcast %cst_31 : f32 to vector<16x128xf32>
      %52 = arith.maximumf %50, %51 : vector<16x128xf32>
      %c0_32 = arith.constant 0 : index
      %c0_33 = arith.constant 0 : index
      %c0_34 = arith.constant 0 : index
      %53 = vector.load %arg8[%c0_32, %c0_33, %c0_34] : memref<1x16x128xf32, #tpu.memory_space<vmem>>, vector<1x16x128xf32>
      %54 = vector.shape_cast %53 : vector<1x16x128xf32> to vector<16x128xf32>
      %55 = vector.shape_cast %52 : vector<16x128xf32> to vector<1x16x128xf32>
      tpu.vector_store %arg8[%c0_32, %c0_33, %c0_34], %55 {strides = array<i32>} : memref<1x16x128xf32, #tpu.memory_space<vmem>>, vector<1x16x128xf32>,
    } else {
    }
    return
  }
  func.func @transform_0(%arg0: i32, %arg1: i32) -> (i32, i32, i32) {
    %c0_i32 = arith.constant 0 : i32
    %c0_i32_0 = arith.constant 0 : i32
    return %arg0, %arg1, %c0_i32 : i32, i32, i32
  }
  func.func @transform_1(%arg0: i32, %arg1: i32) -> (i32, i32) {
    %c0_i32 = arith.constant 0 : i32
    %c0_i32_0 = arith.constant 0 : i32
    %c0_i32_1 = arith.constant 0 : i32
    return %c0_i32, %c0_i32_0 : i32, i32
  }
  func.func @transform_2(%arg0: i32, %arg1: i32) -> (i32, i32) {
    %c0_i32 = arith.constant 0 : i32
    %c0_i32_0 = arith.constant 0 : i32
    %c0_i32_1 = arith.constant 0 : i32
    return %c0_i32, %c0_i32_0 : i32, i32
  }
  func.func @transform_3(%arg0: i32, %arg1: i32) -> (i32, i32, i32) {
    %c0_i32 = arith.constant 0 : i32
    %c0_i32_0 = arith.constant 0 : i32
    return %arg0, %c0_i32, %arg1 : i32, i32, i32
  }
  func.func @transform_4(%arg0: i32, %arg1: i32) -> (i32, i32) {
    %c0_i32 = arith.constant 0 : i32
    %c0_i32_0 = arith.constant 0 : i32
    %c0_i32_1 = arith.constant 0 : i32
    return %c0_i32, %c0_i32_0 : i32, i32
  }
  func.func @transform_5(%arg0: i32, %arg1: i32) -> (i32, i32) {
    %c0_i32 = arith.constant 0 : i32
    %c0_i32_0 = arith.constant 0 : i32
    %c0_i32_1 = arith.constant 0 : i32
    return %c0_i32, %c0_i32_0 : i32, i32
  }
  func.func @transform_6(%arg0: i32, %arg1: i32) -> (i32, i32, i32) {
    %c0_i32 = arith.constant 0 : i32
    %c0_i32_0 = arith.constant 0 : i32
    %c0_i32_1 = arith.constant 0 : i32
    return %arg0, %c0_i32, %c0_i32_0 : i32, i32, i32
  }
}

</mosaic_0001>

<llo_original>
// kernel: gnn_forward.1
$region0: #{gnn_forward.1}
  #allocation0 [shape = 'u32[]', space=smem, size = 0x4, offset = 0x4, fixed_abs, tag = 'smem constant byte address 0x4 - core index']
  #allocation1 [shape = 'u32[144,128]{1,0:T(1,128)}', space=vmem, size = 0x12000, scoped, tag = 'internal scratch']
  %s0 = inlined_call_operand.vmem [shape: bf16[2,128,128], index: 0, kind: input, shape index: {}]
  %s1 = inlined_call_operand.vmem [shape: f32[1,128], index: 1, kind: input, shape index: {}]
  %s2 = inlined_call_operand.vmem [shape: f32[1,128], index: 2, kind: input, shape index: {}]
  %s3 = inlined_call_operand.vmem [shape: bf16[2,16,128], index: 3, kind: input, shape index: {}]
  %s4 = inlined_call_operand.vmem [shape: bf16[128,128], index: 4, kind: input, shape index: {}]
  %s5 = inlined_call_operand.vmem [shape: f32[1,128], index: 5, kind: input, shape index: {}]
  %s6 = inlined_call_operand.vmem [shape: f32[2,16,128], index: 6, kind: output, shape index: {}]
  %s7 = sld [smem:[#allocation0]]
  $region65: #{gnn_forward.1} parent=0
    _
  %s9 = ssub.s32 1, %s7
  %s10 = scalar_select 0, %s9, %s7
  loop: start=0, step=1, limit=4
  $region2: #{gnn_forward.1} parent=0 // loop_pre_header
    _
  $region3: #{gnn_forward.1} parent=0 // loop_header
    %s12 = sphi 0, %s16
    %p13 = scmp.ge.s32.totalorder %s12, 4
    %s19 = sphi 0, %s31
    %s20 = sphi 0, %s27
    %s21 = sphi 0, %s19
    %s22 = sphi 0, %s20
    %s23 = sphi 0, %s21
    %s24 = sphi 0, %s22
    %s36 = sphi 0, %s38
    %s39 = sphi 0, %s36
    %s40 = sphi 0, %s39
    %s56 = sphi 0, %s40
    %s60 = sphi 0, %s60
    %s62 = sphi 0, %s60
    %s63 = sphi 0, %s62
    %s77 = sphi 0, %s63
    %s81 = sphi 0, %s81
    %s83 = sphi 0, %s81
    %s84 = sphi 0, %s83
    %s98 = sphi 0, %s84
    %s106 = sphi 0, %s108
    %s109 = sphi 0, %s106
    %s110 = sphi 0, %s109
    %s126 = sphi 0, %s110
    %s130 = sphi 0, %s130
    %s132 = sphi 0, %s130
    %s133 = sphi 0, %s132
    %s147 = sphi 0, %s133
    %s151 = sphi 0, %s151
    %s153 = sphi 0, %s151
    %s154 = sphi 0, %s153
    %s168 = sphi 0, %s154
    %s174 = sphi 0, %s176
    %s177 = sphi 0, %s174
    %s178 = sphi 0, %s177
    %s194 = sphi 0, %s178
  $region4: #{gnn_forward.1} parent=0 // loop_header_branch
    %15 = sbr.rel (%p13) target = $region8
  $region5: #{gnn_forward.1} parent=0 // loop_body
    %s17 = ssub.s32 %s12, 1
    %s18 = ssub.s32 %s12, 2
    %s25 = sadd.s32 1, %s20
    %p26 = scmp.ge.s32.totalorder %s25, 1
    %s27 = scalar_select %p26, 0, %s25
    %s28 = sadd.s32 1, %s19
    %s29 = scalar_select %p26, %s28, %s19
    %p30 = scmp.ge.s32.totalorder %s29, 2
    %s31 = scalar_select %p30, 0, %s29
    %s32 = ssub.s32 %s19, %s31
    %s33 = ssub.s32 %s20, %s27
    %s34 = sor.u32 %s32, %s33
    %p35 = scmp.eq.s32.totalorder %s34, 0
    %s37 = sadd.s32 %s36, 1
    %s38 = scalar_select %p35, %s36, %s37
    %p41 = pneg %p35
    %p42 = scmp.eq.s32.totalorder %s12, 1
    %p43 = por %p41, %p42
    %p44 = scmp.ne.s32.totalorder %s36, %s39
    %p45 = scmp.eq.s32.totalorder %s12, 0
    %p46 = por %p44, %p45
    %p47 = scmp.ne.s32.totalorder %s36, %s39
    %p48 = scmp.eq.s32.totalorder %s17, 1
    %p49 = por %p47, %p48
    %p50 = scmp.ne.s32.totalorder %s39, %s40
    %p51 = scmp.eq.s32.totalorder %s17, 0
    %p52 = por %p50, %p51
    %p53 = scmp.ne.s32.totalorder %s39, %s40
    %p54 = scmp.eq.s32.totalorder %s18, 1
    %p55 = por %p53, %p54
    %p57 = scmp.ne.s32.totalorder %s40, %s56
    %p58 = scmp.eq.s32.totalorder %s18, 0
    %p59 = por %p57, %p58
    %s61 = sadd.s32 %s60, 1
    %p64 = scmp.eq.s32.totalorder %s12, 1
    %p65 = scmp.ne.s32.totalorder %s60, %s62
    %p66 = scmp.eq.s32.totalorder %s12, 0
    %p67 = por %p65, %p66
    %p68 = scmp.ne.s32.totalorder %s60, %s62
    %p69 = scmp.eq.s32.totalorder %s17, 1
    %p70 = por %p68, %p69
    %p71 = scmp.ne.s32.totalorder %s62, %s63
    %p72 = scmp.eq.s32.totalorder %s17, 0
    %p73 = por %p71, %p72
    %p74 = scmp.ne.s32.totalorder %s62, %s63
    %p75 = scmp.eq.s32.totalorder %s18, 1
    %p76 = por %p74, %p75
    %p78 = scmp.ne.s32.totalorder %s63, %s77
    %p79 = scmp.eq.s32.totalorder %s18, 0
    %p80 = por %p78, %p79
    %s82 = sadd.s32 %s81, 1
    %p85 = scmp.eq.s32.totalorder %s12, 1
    %p86 = scmp.ne.s32.totalorder %s81, %s83
    %p87 = scmp.eq.s32.totalorder %s12, 0
    %p88 = por %p86, %p87
    %p89 = scmp.ne.s32.totalorder %s81, %s83
    %p90 = scmp.eq.s32.totalorder %s17, 1
    %p91 = por %p89, %p90
    %p92 = scmp.ne.s32.totalorder %s83, %s84
    %p93 = scmp.eq.s32.totalorder %s17, 0
    %p94 = por %p92, %p93
    %p95 = scmp.ne.s32.totalorder %s83, %s84
    %p96 = scmp.eq.s32.totalorder %s18, 1
    %p97 = por %p95, %p96
    %p99 = scmp.ne.s32.totalorder %s84, %s98
    %p100 = scmp.eq.s32.totalorder %s18, 0
    %p101 = por %p99, %p100
    %s102 = ssub.s32 %s19, %s31
    %s103 = ssub.s32 %s20, %s27
    %s104 = sor.u32 %s102, %s103
    %p105 = scmp.eq.s32.totalorder %s104, 0
    %s107 = sadd.s32 %s106, 1
    %s108 = scalar_select %p105, %s106, %s107
    %p111 = pneg %p105
    %p112 = scmp.eq.s32.totalorder %s12, 1
    %p113 = por %p111, %p112
    %p114 = scmp.ne.s32.totalorder %s106, %s109
    %p115 = scmp.eq.s32.totalorder %s12, 0
    %p116 = por %p114, %p115
    %p117 = scmp.ne.s32.totalorder %s106, %s109
    %p118 = scmp.eq.s32.totalorder %s17, 1
    %p119 = por %p117, %p118
    %p120 = scmp.ne.s32.totalorder %s109, %s110
    %p121 = scmp.eq.s32.totalorder %s17, 0
    %p122 = por %p120, %p121
    %p123 = scmp.ne.s32.totalorder %s109, %s110
    %p124 = scmp.eq.s32.totalorder %s18, 1
    %p125 = por %p123, %p124
    %p127 = scmp.ne.s32.totalorder %s110, %s126
    %p128 = scmp.eq.s32.totalorder %s18, 0
    %p129 = por %p127, %p128
    %s131 = sadd.s32 %s130, 1
    %p134 = scmp.eq.s32.totalorder %s12, 1
    %p135 = scmp.ne.s32.totalorder %s130, %s132
    %p136 = scmp.eq.s32.totalorder %s12, 0
    %p137 = por %p135, %p136
    %p138 = scmp.ne.s32.totalorder %s130, %s132
    %p139 = scmp.eq.s32.totalorder %s17, 1
    %p140 = por %p138, %p139
    %p141 = scmp.ne.s32.totalorder %s132, %s133
    %p142 = scmp.eq.s32.totalorder %s17, 0
    %p143 = por %p141, %p142
    %p144 = scmp.ne.s32.totalorder %s132, %s133
    %p145 = scmp.eq.s32.totalorder %s18, 1
    %p146 = por %p144, %p145
    %p148 = scmp.ne.s32.totalorder %s133, %s147
    %p149 = scmp.eq.s32.totalorder %s18, 0
    %p150 = por %p148, %p149
    %s152 = sadd.s32 %s151, 1
    %p155 = scmp.eq.s32.totalorder %s12, 1
    %p156 = scmp.ne.s32.totalorder %s151, %s153
    %p157 = scmp.eq.s32.totalorder %s12, 0
    %p158 = por %p156, %p157
    %p159 = scmp.ne.s32.totalorder %s151, %s153
    %p160 = scmp.eq.s32.totalorder %s17, 1
    %p161 = por %p159, %p160
    %p162 = scmp.ne.s32.totalorder %s153, %s154
    %p163 = scmp.eq.s32.totalorder %s17, 0
    %p164 = por %p162, %p163
    %p165 = scmp.ne.s32.totalorder %s153, %s154
    %p166 = scmp.eq.s32.totalorder %s18, 1
    %p167 = por %p165, %p166
    %p169 = scmp.ne.s32.totalorder %s154, %s168
    %p170 = scmp.eq.s32.totalorder %s18, 0
    %p171 = por %p169, %p170
    %s172 = ssub.s32 %s19, %s31
    %p173 = scmp.eq.s32.totalorder %s172, 0
    %s175 = sadd.s32 %s174, 1
    %s176 = scalar_select %p173, %s174, %s175
    %p179 = pneg %p173
    %p180 = scmp.eq.s32.totalorder %s12, 1
    %p181 = por %p179, %p180
    %p182 = scmp.ne.s32.totalorder %s174, %s177
    %p183 = scmp.eq.s32.totalorder %s12, 0
    %p184 = por %p182, %p183
    %p185 = scmp.ne.s32.totalorder %s174, %s177
    %p186 = scmp.eq.s32.totalorder %s17, 1
    %p187 = por %p185, %p186
    %p188 = scmp.ne.s32.totalorder %s177, %s178
    %p189 = scmp.eq.s32.totalorder %s17, 0
    %p190 = por %p188, %p189
    %p191 = scmp.ne.s32.totalorder %s177, %s178
    %p192 = scmp.eq.s32.totalorder %s18, 1
    %p193 = por %p191, %p192
    %p195 = scmp.ne.s32.totalorder %s178, %s194
    %p196 = scmp.eq.s32.totalorder %s18, 0
    %p197 = por %p195, %p196
    %p198 = scmp.le.s32.totalorder 1, %s12
    %p199 = scmp.lt.s32.totalorder %s12, 3
    %p200 = pnand %p198, %p199
    %p201 = pneg %p200
    // Predicated region
    $region9: #{gnn_forward.1} parent=5 // pred_check
      _
    $region10: #{gnn_forward.1} parent=5 // pred_check_branch
      %203 = sbr.rel (%p200) target = $region12
    $region11: #{gnn_forward.1} parent=5 // pred_region
      %s204 = ssub.s32 %s12, 1
      // Predicated region
      $region13: #{gnn_forward.1} parent=11 // pred_check
        %p205 = pneg %p73
      $region14: #{gnn_forward.1} parent=11 // pred_check_branch
        %207 = sbr.rel (%p205) target = $region16
      $region15: #{gnn_forward.1} parent=11 // pred_region
        _
      $region16: #{gnn_forward.1} parent=11 // pred_fallthru
        _
      // Predicated region
      $region17: #{gnn_forward.1} parent=11 // pred_check
        %p208 = pneg %p94
      $region18: #{gnn_forward.1} parent=11 // pred_check_branch
        %210 = sbr.rel (%p208) target = $region20
      $region19: #{gnn_forward.1} parent=11 // pred_region
        _
      $region20: #{gnn_forward.1} parent=11 // pred_fallthru
        _
      // Predicated region
      $region21: #{gnn_forward.1} parent=11 // pred_check
        %p211 = pneg %p143
      $region22: #{gnn_forward.1} parent=11 // pred_check_branch
        %213 = sbr.rel (%p211) target = $region24
      $region23: #{gnn_forward.1} parent=11 // pred_region
        _
      $region24: #{gnn_forward.1} parent=11 // pred_fallthru
        _
      // Predicated region
      $region25: #{gnn_forward.1} parent=11 // pred_check
        %p214 = pneg %p164
      $region26: #{gnn_forward.1} parent=11 // pred_check_branch
        %216 = sbr.rel (%p214) target = $region28
      $region27: #{gnn_forward.1} parent=11 // pred_region
        _
      $region28: #{gnn_forward.1} parent=11 // pred_fallthru
        _
    $region12: #{gnn_forward.1} parent=5 // pred_fallthru
      _
    %p217 = scmp.lt.s32.totalorder %s12, 2
    // Predicated region
    $region29: #{gnn_forward.1} parent=5 // pred_check
      %p218 = pneg %p217
    $region30: #{gnn_forward.1} parent=5 // pred_check_branch
      %220 = sbr.rel (%p218) target = $region32
    $region31: #{gnn_forward.1} parent=5 // pred_region
      // Predicated region
      $region33: #{gnn_forward.1} parent=31 // pred_check
        %p221 = pneg %p46
      $region34: #{gnn_forward.1} parent=31 // pred_check_branch
        %223 = sbr.rel (%p221) target = $region36
      $region35: #{gnn_forward.1} parent=31 // pred_region
        %s224 = smul.u32 16, %s20
        %p225 = scmp.lt.s32.totalorder %s19, 1
        %s226 = scalar_select %p225, %s19, 1
        %p227 = scmp.lt.s32.totalorder %s224, 15
        %s228 = scalar_select %p227, %s224, 15
        %s229 = smul.addr %s226, 16
        %s230 = sadd.s32 %s228, %s229
        %s231 = smul.addr %s230, 4
        %s232 = scalar_lea.vmem %s0, %s231
        %s233 = smul.u32 16, %s20
      $region36: #{gnn_forward.1} parent=31 // pred_fallthru
        _
      // Predicated region
      $region37: #{gnn_forward.1} parent=31 // pred_check
        %p234 = pneg %p116
      $region38: #{gnn_forward.1} parent=31 // pred_check_branch
        %236 = sbr.rel (%p234) target = $region40
      $region39: #{gnn_forward.1} parent=31 // pred_region
        %p237 = scmp.lt.s32.totalorder %s19, 1
        %s238 = scalar_select %p237, %s19, 1
        %p239 = scmp.lt.s32.totalorder %s20, 0
        %s240 = scalar_select %p239, %s20, 0
        %s241 = smul.addr %s238, 2
        %s242 = sadd.s32 %s240, %s241
        %s243 = smul.addr %s242, 4
        %s244 = scalar_lea.vmem %s3, %s243
      $region40: #{gnn_forward.1} parent=31 // pred_fallthru
        _
    $region32: #{gnn_forward.1} parent=5 // pred_fallthru
      _
    %p245 = scmp.le.s32.totalorder 1, %s12
    %p246 = scmp.lt.s32.totalorder %s12, 3
    %p247 = pnand %p245, %p246
    %p248 = pneg %p247
    // Predicated region
    $region41: #{gnn_forward.1} parent=5 // pred_check
      _
    $region42: #{gnn_forward.1} parent=5 // pred_check_branch
      %250 = sbr.rel (%p247) target = $region44
    $region43: #{gnn_forward.1} parent=5 // pred_region
      %s251 = ssub.s32 %s12, 1
      %s252 = smul.u32 16, %s22
      %p253 = scmp.lt.s32.totalorder %s21, 1
      %s254 = scalar_select %p253, %s21, 1
      %p255 = scmp.lt.s32.totalorder %s252, 15
      %s256 = scalar_select %p255, %s252, 15
      %s257 = smul.addr %s254, 16
      %s258 = sadd.s32 %s256, %s257
      %s259 = smul.addr %s258, 4
      %s260 = scalar_lea.vmem %s0, %s259
      %p261 = pneg %p52
      %p262 = pneg %p49
      %p263 = pneg %p73
      %p264 = pneg %p70
      %p265 = pneg %p94
      %p266 = pneg %p91
      %p267 = scmp.lt.s32.totalorder %s21, 1
      %s268 = scalar_select %p267, %s21, 1
      %p269 = scmp.lt.s32.totalorder %s22, 0
      %s270 = scalar_select %p269, %s22, 0
      %s271 = smul.addr %s268, 2
      %s272 = sadd.s32 %s270, %s271
      %s273 = smul.addr %s272, 4
      %s274 = scalar_lea.vmem %s3, %s273
      %p275 = pneg %p122
      %p276 = pneg %p119
      %p277 = pneg %p143
      %p278 = pneg %p140
      %p279 = pneg %p164
      %p280 = pneg %p161
      %p281 = pneg %p190
      %p282 = pneg %p187
      %p283 = scmp.lt.s32.totalorder %s21, 1
      %s284 = scalar_select %p283, %s21, 1
      %s285 = smul.addr %s284, 2
      %s286 = smul.addr %s285, 8
      %s287 = scalar_lea.vmem %s6, %s286
      %s288 = smul.u32 16, %s22
      %p289 = scmp.lt.s32.totalorder %s21, 1
      %s290 = scalar_select %p289, %s21, 1
      %p291 = scmp.lt.s32.totalorder %s288, 15
      %s292 = scalar_select %p291, %s288, 15
      %s293 = smul.addr %s290, 16
      %s294 = sadd.s32 %s292, %s293
      %s295 = smul.addr %s294, 4
      %s296 = scalar_lea.vmem %s0, %s295
      %s297 = smul.u32 16, %s22
      %p298 = scmp.lt.s32.totalorder %s21, 1
      %s299 = scalar_select %p298, %s21, 1
      %p300 = scmp.lt.s32.totalorder %s22, 0
      %s301 = scalar_select %p300, %s22, 0
      %s302 = smul.addr %s299, 2
      %s303 = sadd.s32 %s301, %s302
      %s304 = smul.addr %s303, 4
      %s305 = scalar_lea.vmem %s3, %s304
      %p306 = scmp.lt.s32.totalorder %s21, 1
      %s307 = scalar_select %p306, %s21, 1
      %s308 = smul.addr %s307, 2
      %s309 = smul.addr %s308, 8
      %s310 = scalar_lea.vmem %s6, %s309
      %p312 = scmp.eq.s32.totalorder %s22, 0
      // Predicated region
      $region45: #{gnn_forward.1} parent=43 // pred_check
        %p313 = pneg %p312
      $region46: #{gnn_forward.1} parent=43 // pred_check_branch
        %315 = sbr.rel (%p313) target = $region48
      $region47: #{gnn_forward.1} parent=43 // pred_region
        %316 = vst [vmem:[%s310] sm:$0xff] 0.0
        %317 = vst [vmem:[%s310 + $0x8] sm:$0xff] 0.0
      $region48: #{gnn_forward.1} parent=43 // pred_fallthru
        _
      %v318 = vld [vmem:[%s296] sm:$0xf]
      %v319 = vld [vmem:[%s296 + $0x4] sm:$0xf]
      %v320 = vld [vmem:[%s296 + $0x8] sm:$0xf]
      %v321 = vld [vmem:[%s296 + $0xc] sm:$0xf]
      %v322 = vld [vmem:[%s296 + $0x10] sm:$0xf]
      %v323 = vld [vmem:[%s296 + $0x14] sm:$0xf]
      %v324 = vld [vmem:[%s296 + $0x18] sm:$0xf]
      %v325 = vld [vmem:[%s296 + $0x1c] sm:$0xf]
      %v326 = vld [vmem:[%s296 + $0x20] sm:$0xf]
      %v327 = vld [vmem:[%s296 + $0x24] sm:$0xf]
      %v328 = vld [vmem:[%s296 + $0x28] sm:$0xf]
      %v329 = vld [vmem:[%s296 + $0x2c] sm:$0xf]
      %v330 = vld [vmem:[%s296 + $0x30] sm:$0xf]
      %v331 = vld [vmem:[%s296 + $0x34] sm:$0xf]
      %v332 = vld [vmem:[%s296 + $0x38] sm:$0xf]
      %v333 = vld [vmem:[%s296 + $0x3c] sm:$0xf]
      %v334 = vunpack.c.l.bf16 %v318
      %v335 = vunpack.c.l.bf16 %v319
      %v336 = vunpack.c.l.bf16 %v320
      %v337 = vunpack.c.l.bf16 %v321
      %v338 = vunpack.c.l.bf16 %v322
      %v339 = vunpack.c.l.bf16 %v323
      %v340 = vunpack.c.l.bf16 %v324
      %v341 = vunpack.c.l.bf16 %v325
      %v342 = vunpack.c.l.bf16 %v326
      %v343 = vunpack.c.l.bf16 %v327
      %v344 = vunpack.c.l.bf16 %v328
      %v345 = vunpack.c.l.bf16 %v329
      %v346 = vunpack.c.l.bf16 %v330
      %v347 = vunpack.c.l.bf16 %v331
      %v348 = vunpack.c.l.bf16 %v332
      %v349 = vunpack.c.l.bf16 %v333
      %350 = vadd.xlane.f32.xlu0 %v334
      %v351 = vpop.xlane.xlu0 %350
      %352 = vadd.xlane.f32.xlu0 %v335
      %v353 = vpop.xlane.xlu0 %352
      %354 = vadd.xlane.f32.xlu0 %v336
      %v355 = vpop.xlane.xlu0 %354
      %356 = vadd.xlane.f32.xlu0 %v337
      %v357 = vpop.xlane.xlu0 %356
      %358 = vadd.xlane.f32.xlu0 %v338
      %v359 = vpop.xlane.xlu0 %358
      %360 = vadd.xlane.f32.xlu0 %v339
      %v361 = vpop.xlane.xlu0 %360
      %362 = vadd.xlane.f32.xlu0 %v340
      %v363 = vpop.xlane.xlu0 %362
      %364 = vadd.xlane.f32.xlu0 %v341
      %v365 = vpop.xlane.xlu0 %364
      %366 = vadd.xlane.f32.xlu0 %v342
      %v367 = vpop.xlane.xlu0 %366
      %368 = vadd.xlane.f32.xlu0 %v343
      %v369 = vpop.xlane.xlu0 %368
      %370 = vadd.xlane.f32.xlu0 %v344
      %v371 = vpop.xlane.xlu0 %370
      %372 = vadd.xlane.f32.xlu0 %v345
      %v373 = vpop.xlane.xlu0 %372
      %374 = vadd.xlane.f32.xlu0 %v346
      %v375 = vpop.xlane.xlu0 %374
      %376 = vadd.xlane.f32.xlu0 %v347
      %v377 = vpop.xlane.xlu0 %376
      %378 = vadd.xlane.f32.xlu0 %v348
      %v379 = vpop.xlane.xlu0 %378
      %380 = vadd.xlane.f32.xlu0 %v349
      %v381 = vpop.xlane.xlu0 %380
      %v382 = vmul.f32 %v351, 0.03125
      %v383 = vmul.f32 %v353, 0.03125
      %v384 = vmul.f32 %v355, 0.03125
      %v385 = vmul.f32 %v357, 0.03125
      %v386 = vmul.f32 %v359, 0.03125
      %v387 = vmul.f32 %v361, 0.03125
      %v388 = vmul.f32 %v363, 0.03125
      %v389 = vmul.f32 %v365, 0.03125
      %v390 = vmul.f32 %v367, 0.03125
      %v391 = vmul.f32 %v369, 0.03125
      %v392 = vmul.f32 %v371, 0.03125
      %v393 = vmul.f32 %v373, 0.03125
      %v394 = vmul.f32 %v375, 0.03125
      %v395 = vmul.f32 %v377, 0.03125
      %v396 = vmul.f32 %v379, 0.03125
      %v397 = vmul.f32 %v381, 0.03125
      %v398 = vmul.f32 %v334, %v334
      %v399 = vmul.f32 %v335, %v335
      %v400 = vmul.f32 %v336, %v336
      %v401 = vmul.f32 %v337, %v337
      %v402 = vmul.f32 %v338, %v338
      %v403 = vmul.f32 %v339, %v339
      %v404 = vmul.f32 %v340, %v340
      %v405 = vmul.f32 %v341, %v341
      %v406 = vmul.f32 %v342, %v342
      %v407 = vmul.f32 %v343, %v343
      %v408 = vmul.f32 %v344, %v344
      %v409 = vmul.f32 %v345, %v345
      %v410 = vmul.f32 %v346, %v346
      %v411 = vmul.f32 %v347, %v347
      %v412 = vmul.f32 %v348, %v348
      %v413 = vmul.f32 %v349, %v349
      %414 = vadd.xlane.f32.xlu0 %v398
      %v415 = vpop.xlane.xlu0 %414
      %416 = vadd.xlane.f32.xlu0 %v399
      %v417 = vpop.xlane.xlu0 %416
      %418 = vadd.xlane.f32.xlu0 %v400
      %v419 = vpop.xlane.xlu0 %418
      %420 = vadd.xlane.f32.xlu0 %v401
      %v421 = vpop.xlane.xlu0 %420
      %422 = vadd.xlane.f32.xlu0 %v402
      %v423 = vpop.xlane.xlu0 %422
      %424 = vadd.xlane.f32.xlu0 %v403
      %v425 = vpop.xlane.xlu0 %424
      %426 = vadd.xlane.f32.xlu0 %v404
      %v427 = vpop.xlane.xlu0 %426
      %428 = vadd.xlane.f32.xlu0 %v405
      %v429 = vpop.xlane.xlu0 %428
      %430 = vadd.xlane.f32.xlu0 %v406
      %v431 = vpop.xlane.xlu0 %430
      %432 = vadd.xlane.f32.xlu0 %v407
      %v433 = vpop.xlane.xlu0 %432
      %434 = vadd.xlane.f32.xlu0 %v408
      %v435 = vpop.xlane.xlu0 %434
      %436 = vadd.xlane.f32.xlu0 %v409
      %v437 = vpop.xlane.xlu0 %436
      %438 = vadd.xlane.f32.xlu0 %v410
      %v439 = vpop.xlane.xlu0 %438
      %440 = vadd.xlane.f32.xlu0 %v411
      %v441 = vpop.xlane.xlu0 %440
      %442 = vadd.xlane.f32.xlu0 %v412
      %v443 = vpop.xlane.xlu0 %442
      %444 = vadd.xlane.f32.xlu0 %v413
      %v445 = vpop.xlane.xlu0 %444
      %v446 = vmul.f32 %v415, 0.03125
      %v447 = vmul.f32 %v417, 0.03125
      %v448 = vmul.f32 %v419, 0.03125
      %v449 = vmul.f32 %v421, 0.03125
      %v450 = vmul.f32 %v423, 0.03125
      %v451 = vmul.f32 %v425, 0.03125
      %v452 = vmul.f32 %v427, 0.03125
      %v453 = vmul.f32 %v429, 0.03125
      %v454 = vmul.f32 %v431, 0.03125
      %v455 = vmul.f32 %v433, 0.03125
      %v456 = vmul.f32 %v435, 0.03125
      %v457 = vmul.f32 %v437, 0.03125
      %v458 = vmul.f32 %v439, 0.03125
      %v459 = vmul.f32 %v441, 0.03125
      %v460 = vmul.f32 %v443, 0.03125
      %v461 = vmul.f32 %v445, 0.03125
      %v462 = vmul.f32 %v382, %v382
      %v463 = vmul.f32 %v383, %v383
      %v464 = vmul.f32 %v384, %v384
      %v465 = vmul.f32 %v385, %v385
      %v466 = vmul.f32 %v386, %v386
      %v467 = vmul.f32 %v387, %v387
      %v468 = vmul.f32 %v388, %v388
      %v469 = vmul.f32 %v389, %v389
      %v470 = vmul.f32 %v390, %v390
      %v471 = vmul.f32 %v391, %v391
      %v472 = vmul.f32 %v392, %v392
      %v473 = vmul.f32 %v393, %v393
      %v474 = vmul.f32 %v394, %v394
      %v475 = vmul.f32 %v395, %v395
      %v476 = vmul.f32 %v396, %v396
      %v477 = vmul.f32 %v397, %v397
      %v478 = vsub.f32 %v446, %v462
      %v479 = vsub.f32 %v447, %v463
      %v480 = vsub.f32 %v448, %v464
      %v481 = vsub.f32 %v449, %v465
      %v482 = vsub.f32 %v450, %v466
      %v483 = vsub.f32 %v451, %v467
      %v484 = vsub.f32 %v452, %v468
      %v485 = vsub.f32 %v453, %v469
      %v486 = vsub.f32 %v454, %v470
      %v487 = vsub.f32 %v455, %v471
      %v488 = vsub.f32 %v456, %v472
      %v489 = vsub.f32 %v457, %v473
      %v490 = vsub.f32 %v458, %v474
      %v491 = vsub.f32 %v459, %v475
      %v492 = vsub.f32 %v460, %v476
      %v493 = vsub.f32 %v461, %v477
      %v494 = vsub.f32 %v334, %v382
      %v495 = vsub.f32 %v335, %v383
      %v496 = vsub.f32 %v336, %v384
      %v497 = vsub.f32 %v337, %v385
      %v498 = vsub.f32 %v338, %v386
      %v499 = vsub.f32 %v339, %v387
      %v500 = vsub.f32 %v340, %v388
      %v501 = vsub.f32 %v341, %v389
      %v502 = vsub.f32 %v342, %v390
      %v503 = vsub.f32 %v343, %v391
      %v504 = vsub.f32 %v344, %v392
      %v505 = vsub.f32 %v345, %v393
      %v506 = vsub.f32 %v346, %v394
      %v507 = vsub.f32 %v347, %v395
      %v508 = vsub.f32 %v348, %v396
      %v509 = vsub.f32 %v349, %v397
      %v510 = vadd.f32 %v478, 1e-05
      %v511 = vadd.f32 %v479, 1e-05
      %v512 = vadd.f32 %v480, 1e-05
      %v513 = vadd.f32 %v481, 1e-05
      %v514 = vadd.f32 %v482, 1e-05
      %v515 = vadd.f32 %v483, 1e-05
      %v516 = vadd.f32 %v484, 1e-05
      %v517 = vadd.f32 %v485, 1e-05
      %v518 = vadd.f32 %v486, 1e-05
      %v519 = vadd.f32 %v487, 1e-05
      %v520 = vadd.f32 %v488, 1e-05
      %v521 = vadd.f32 %v489, 1e-05
      %v522 = vadd.f32 %v490, 1e-05
      %v523 = vadd.f32 %v491, 1e-05
      %v524 = vadd.f32 %v492, 1e-05
      %v525 = vadd.f32 %v493, 1e-05
      %v526 = vrsqrt.pop %v510
      %v527 = vrsqrt.pop %v511
      %v528 = vrsqrt.pop %v512
      %v529 = vrsqrt.pop %v513
      %v530 = vrsqrt.pop %v514
      %v531 = vrsqrt.pop %v515
      %v532 = vrsqrt.pop %v516
      %v533 = vrsqrt.pop %v517
      %v534 = vrsqrt.pop %v518
      %v535 = vrsqrt.pop %v519
      %v536 = vrsqrt.pop %v520
      %v537 = vrsqrt.pop %v521
      %v538 = vrsqrt.pop %v522
      %v539 = vrsqrt.pop %v523
      %v540 = vrsqrt.pop %v524
      %v541 = vrsqrt.pop %v525
      %v542 = vmul.f32 %v494, %v526
      %v543 = vmul.f32 %v495, %v527
      %v544 = vmul.f32 %v496, %v528
      %v545 = vmul.f32 %v497, %v529
      %v546 = vmul.f32 %v498, %v530
      %v547 = vmul.f32 %v499, %v531
      %v548 = vmul.f32 %v500, %v532
      %v549 = vmul.f32 %v501, %v533
      %v550 = vmul.f32 %v502, %v534
      %v551 = vmul.f32 %v503, %v535
      %v552 = vmul.f32 %v504, %v536
      %v553 = vmul.f32 %v505, %v537
      %v554 = vmul.f32 %v506, %v538
      %v555 = vmul.f32 %v507, %v539
      %v556 = vmul.f32 %v508, %v540
      %v557 = vmul.f32 %v509, %v541
      %v558 = vld [vmem:[%s1] sm:$0x1]
      %v560 = vlaneseq
      %v561 = vshrl.u32 %v560, 7
      %v562 = vsub.s32 0, %v561
      %v563 = vrot.slane %v558, %v562
      %v565 = vmul.f32 %v542, %v563
      %v566 = vmul.f32 %v543, %v563
      %v567 = vmul.f32 %v544, %v563
      %v568 = vmul.f32 %v545, %v563
      %v569 = vmul.f32 %v546, %v563
      %v570 = vmul.f32 %v547, %v563
      %v571 = vmul.f32 %v548, %v563
      %v572 = vmul.f32 %v549, %v563
      %v573 = vmul.f32 %v550, %v563
      %v574 = vmul.f32 %v551, %v563
      %v575 = vmul.f32 %v552, %v563
      %v576 = vmul.f32 %v553, %v563
      %v577 = vmul.f32 %v554, %v563
      %v578 = vmul.f32 %v555, %v563
      %v579 = vmul.f32 %v556, %v563
      %v580 = vmul.f32 %v557, %v563
      %v581 = vld [vmem:[%s2] sm:$0x1]
      %v583 = vlaneseq
      %v584 = vshrl.u32 %v583, 7
      %v585 = vsub.s32 0, %v584
      %v586 = vrot.slane %v581, %v585
      %v588 = vadd.f32 %v565, %v586
      %v589 = vadd.f32 %v566, %v586
      %v590 = vadd.f32 %v567, %v586
      %v591 = vadd.f32 %v568, %v586
      %v592 = vadd.f32 %v569, %v586
      %v593 = vadd.f32 %v570, %v586
      %v594 = vadd.f32 %v571, %v586
      %v595 = vadd.f32 %v572, %v586
      %v596 = vadd.f32 %v573, %v586
      %v597 = vadd.f32 %v574, %v586
      %v598 = vadd.f32 %v575, %v586
      %v599 = vadd.f32 %v576, %v586
      %v600 = vadd.f32 %v577, %v586
      %v601 = vadd.f32 %v578, %v586
      %v602 = vadd.f32 %v579, %v586
      %v603 = vadd.f32 %v580, %v586
      %v604 = vld [vmem:[%s310] sm:$0xff]
      %v605 = vld [vmem:[%s310 + $0x8] sm:$0xff]
      %v606 = vld [vmem:[%s305] sm:$0xf]
      %v607 = vld [vmem:[%s305 + $0x4] sm:$0xf]
      %v608 = vpack.c.bf16 %v589, %v588
      %v609 = vpack.c.bf16 %v591, %v590
      %v610 = vpack.c.bf16 %v593, %v592
      %v611 = vpack.c.bf16 %v595, %v594
      %v612 = vpack.c.bf16 %v597, %v596
      %v613 = vpack.c.bf16 %v599, %v598
      %v614 = vpack.c.bf16 %v601, %v600
      %v615 = vpack.c.bf16 %v603, %v602
      %v618 = vunpack.c.l.b16 %v606
      %v619 = vunpack.c.l.b16 %v607
      %v620 = vpack.c.b16 %v619, %v618
      %622 = vmatprep.subr.bf16.mxu0 0
      %623 = vmatpush1.bf16.msra.mxu0 %v608
      %624 = vmatprep.subr.bf16.mxu0 0
      %625 = vmatpush1.bf16.msra.mxu0 %v609
      %626 = vmatprep.subr.bf16.mxu0 0
      %627 = vmatpush1.bf16.msra.mxu0 %v610
      %628 = vmatprep.subr.bf16.mxu0 0
      %629 = vmatpush1.bf16.msra.mxu0 %v611
      %630 = vmatprep.subr.bf16.mxu0 0
      %631 = vmatpush1.bf16.msra.mxu0 %v612
      %632 = vmatprep.subr.bf16.mxu0 0
      %633 = vmatpush1.bf16.msra.mxu0 %v613
      %634 = vmatprep.subr.bf16.mxu0 0
      %635 = vmatpush1.bf16.msra.mxu0 %v614
      %636 = vmatprep.subr.bf16.mxu0 0
      %637 = vmatpush1.bf16.msra.mxu0 %v615
      %638 = vmatprep.subr.bf16.mxu0 0
      %639 = vmatpush1.bf16.msra.mxu0 0
      %640 = vmatprep.subr.bf16.mxu0 0
      %641 = vmatpush1.bf16.msra.mxu0 0
      %642 = vmatprep.subr.bf16.mxu0 0
      %643 = vmatpush1.bf16.msra.mxu0 0
      %644 = vmatprep.subr.bf16.mxu0 0
      %645 = vmatpush1.bf16.msra.mxu0 0
      %646 = vmatprep.subr.bf16.mxu0 0
      %647 = vmatpush1.bf16.msra.mxu0 0
      %648 = vmatprep.subr.bf16.mxu0 0
      %649 = vmatpush1.bf16.msra.mxu0 0
      %650 = vmatprep.subr.bf16.mxu0 0
      %651 = vmatpush1.bf16.msra.mxu0 0
      %652 = vmatprep.subr.bf16.mxu0 0
      %653 = vmatpush1.bf16.msra.mxu0 0
      %654 = vmatprep.mubr.bf16.mxu0 0
      %655 = vmatmul.mubr.bf16.gmra.mrb[0].mxu0 %v620
      %v656 = vpop.f32.mrb[0].mxu0
      %v657 = vadd.f32 0.0, %v656
      %v658 = vpop.f32.mrb[0].mxu0
      %v659 = vpop.f32.mrb[0].mxu0
      %v660 = vadd.f32 0.0, %v659
      %v661 = vpop.f32.mrb[0].mxu0
      %662 = vdwg.mxu0
      %v663 = vadd.f32 %v604, %v657
      %v664 = vadd.f32 %v605, %v660
      %665 = vst [vmem:[%s310] sm:$0xff] %v663
      %666 = vst [vmem:[%s310 + $0x8] sm:$0xff] %v664
      // Predicated region
      $region49: #{gnn_forward.1} parent=43 // pred_check
        %p667 = pneg %p312
      $region50: #{gnn_forward.1} parent=43 // pred_check_branch
        %669 = sbr.rel (%p667) target = $region52
      $region51: #{gnn_forward.1} parent=43 // pred_region
        %v670 = vld [vmem:[%s310] sm:$0xff]
        %v671 = vld [vmem:[%s310 + $0x8] sm:$0xff]
        %v672 = vpack.c.bf16 %v671, %v670
        %v673 = vld [vmem:[%s4] sm:$0xf]
        %v674 = vld [vmem:[%s4 + $0x4] sm:$0xf]
        %v675 = vld [vmem:[%s4 + $0x8] sm:$0xf]
        %v676 = vld [vmem:[%s4 + $0xc] sm:$0xf]
        %v677 = vld [vmem:[%s4 + $0x10] sm:$0xf]
        %v678 = vld [vmem:[%s4 + $0x14] sm:$0xf]
        %v679 = vld [vmem:[%s4 + $0x18] sm:$0xf]
        %v680 = vld [vmem:[%s4 + $0x1c] sm:$0xf]
        %v681 = vld [vmem:[%s4 + $0x20] sm:$0xf]
        %v682 = vld [vmem:[%s4 + $0x24] sm:$0xf]
        %v683 = vld [vmem:[%s4 + $0x28] sm:$0xf]
        %v684 = vld [vmem:[%s4 + $0x2c] sm:$0xf]
        %v685 = vld [vmem:[%s4 + $0x30] sm:$0xf]
        %v686 = vld [vmem:[%s4 + $0x34] sm:$0xf]
        %v687 = vld [vmem:[%s4 + $0x38] sm:$0xf]
        %v688 = vld [vmem:[%s4 + $0x3c] sm:$0xf]
        %v689 = vld [vmem:[%s5] sm:$0x1]
        %v691 = vlaneseq
        %v692 = vshrl.u32 %v691, 7
        %v693 = vsub.s32 0, %v692
        %v694 = vrot.slane %v689, %v693
        %v712 = vunpack.c.l.b16 %v673
        %v713 = vunpack.c.l.b16 %v674
        %v714 = vunpack.c.l.b16 %v675
        %v715 = vunpack.c.l.b16 %v676
        %v716 = vunpack.c.l.b16 %v677
        %v717 = vunpack.c.l.b16 %v678
        %v718 = vunpack.c.l.b16 %v679
        %v719 = vunpack.c.l.b16 %v680
        %v720 = vunpack.c.l.b16 %v681
        %v721 = vunpack.c.l.b16 %v682
        %v722 = vunpack.c.l.b16 %v683
        %v723 = vunpack.c.l.b16 %v684
        %v724 = vunpack.c.l.b16 %v685
        %v725 = vunpack.c.l.b16 %v686
        %v726 = vunpack.c.l.b16 %v687
        %v727 = vunpack.c.l.b16 %v688
        %v728 = vpack.c.b16 %v713, %v712
        %v729 = vpack.c.b16 %v715, %v714
        %v730 = vpack.c.b16 %v717, %v716
        %v731 = vpack.c.b16 %v719, %v718
        %v732 = vpack.c.b16 %v721, %v720
        %v733 = vpack.c.b16 %v723, %v722
        %v734 = vpack.c.b16 %v725, %v724
        %v735 = vpack.c.b16 %v727, %v726
        %744 = vmatprep.subr.bf16.mxu0 0
        %745 = vmatpush1.bf16.msra.mxu0 %v728
        %746 = vmatprep.subr.bf16.mxu0 0
        %747 = vmatpush1.bf16.msra.mxu0 %v729
        %748 = vmatprep.subr.bf16.mxu0 0
        %749 = vmatpush1.bf16.msra.mxu0 %v730
        %750 = vmatprep.subr.bf16.mxu0 0
        %751 = vmatpush1.bf16.msra.mxu0 %v731
        %752 = vmatprep.subr.bf16.mxu0 0
        %753 = vmatpush1.bf16.msra.mxu0 %v732
        %754 = vmatprep.subr.bf16.mxu0 0
        %755 = vmatpush1.bf16.msra.mxu0 %v733
        %756 = vmatprep.subr.bf16.mxu0 0
        %757 = vmatpush1.bf16.msra.mxu0 %v734
        %758 = vmatprep.subr.bf16.mxu0 0
        %759 = vmatpush1.bf16.msra.mxu0 %v735
        %760 = vmatprep.subr.bf16.mxu0 0
        %761 = vmatpush1.bf16.msra.mxu0 0
        %762 = vmatprep.subr.bf16.mxu0 0
        %763 = vmatpush1.bf16.msra.mxu0 0
        %764 = vmatprep.subr.bf16.mxu0 0
        %765 = vmatpush1.bf16.msra.mxu0 0
        %766 = vmatprep.subr.bf16.mxu0 0
        %767 = vmatpush1.bf16.msra.mxu0 0
        %768 = vmatprep.subr.bf16.mxu0 0
        %769 = vmatpush1.bf16.msra.mxu0 0
        %770 = vmatprep.subr.bf16.mxu0 0
        %771 = vmatpush1.bf16.msra.mxu0 0
        %772 = vmatprep.subr.bf16.mxu0 0
        %773 = vmatpush1.bf16.msra.mxu0 0
        %774 = vmatprep.subr.bf16.mxu0 0
        %775 = vmatpush1.bf16.msra.mxu0 0
        %776 = vmatprep.mubr.bf16.mxu0 0
        %777 = vmatmul.mubr.bf16.gmra.mrb[0].mxu0 %v672
        %v778 = vpop.f32.mrb[0].mxu0
        %v779 = vadd.f32 %v694, %v778
        %v780 = vpop.f32.mrb[0].mxu0
        %v781 = vpop.f32.mrb[0].mxu0
        %v782 = vadd.f32 %v694, %v781
        %v783 = vpop.f32.mrb[0].mxu0
        %784 = vdwg.mxu0
        %v785 = vmax.f32 %v779, 0.0
        %v786 = vmax.f32 %v782, 0.0
        %787 = vst [vmem:[%s310] sm:$0xff] %v785
        %788 = vst [vmem:[%s310 + $0x8] sm:$0xff] %v786
      $region52: #{gnn_forward.1} parent=43 // pred_fallthru
        _
      %p789 = scmp.lt.s32.totalorder %s21, 1
      %s790 = scalar_select %p789, %s21, 1
      %s791 = smul.addr %s790, 2
      %s792 = smul.addr %s791, 8
      %s793 = scalar_lea.vmem %s6, %s792
      // Predicated region
      $region53: #{gnn_forward.1} parent=43 // pred_check
        %p794 = pneg %p187
      $region54: #{gnn_forward.1} parent=43 // pred_check_branch
        %796 = sbr.rel (%p794) target = $region56
      $region55: #{gnn_forward.1} parent=43 // pred_region
        _
      $region56: #{gnn_forward.1} parent=43 // pred_fallthru
        _
    $region44: #{gnn_forward.1} parent=5 // pred_fallthru
      _
    %p797 = scmp.le.s32.totalorder 2, %s12
    // Predicated region
    $region57: #{gnn_forward.1} parent=5 // pred_check
      %p798 = pneg %p797
    $region58: #{gnn_forward.1} parent=5 // pred_check_branch
      %800 = sbr.rel (%p798) target = $region60
    $region59: #{gnn_forward.1} parent=5 // pred_region
      %s801 = ssub.s32 %s12, 2
      // Predicated region
      $region61: #{gnn_forward.1} parent=59 // pred_check
        %p802 = pneg %p193
      $region62: #{gnn_forward.1} parent=59 // pred_check_branch
        %804 = sbr.rel (%p802) target = $region64
      $region63: #{gnn_forward.1} parent=59 // pred_region
        %p805 = scmp.lt.s32.totalorder %s23, 1
        %s806 = scalar_select %p805, %s23, 1
        %s807 = smul.addr %s806, 2
        %s808 = smul.addr %s807, 8
        %s809 = scalar_lea.vmem %s6, %s808
      $region64: #{gnn_forward.1} parent=59 // pred_fallthru
        _
    $region60: #{gnn_forward.1} parent=5 // pred_fallthru
      _
  $region6: #{gnn_forward.1} parent=0 // loop_footer
    %s16 = sadd.s32 1, %s12
  $region7: #{gnn_forward.1} parent=0 // loop_footer_branch
    %11 = sbr.rel target = $region3
  $region8: #{gnn_forward.1} parent=0 // loop_exit
    _

</llo_original>
